<compile_context>
chip_gen: v6e
topology: v6e:2x2x1
jax: 0.10.0
libtpu: 0.0.40
codegen_flags: <defaults>
</compile_context>

<pallas_src>
import functools

import jax
import jax.numpy as jnp
from jax.experimental import pallas as pl
from jax.experimental.pallas import tpu as pltpu

# ----------------------------- config ---------------------------------------
H = 128          # t5 hidden_size == model_dim
V = 512          # vocab size
B = 2            # batch
S_ENC = 16       # encoder seq len
S_DEC = 8        # decoder seq len
TAU = 0.1
NEG_EPS = 1.0
POS_EPS = 1.0
IGNORE = -100


def _full_spec(shape):
    """BlockSpec covering the whole array (grid=(1,))."""
    return pl.BlockSpec(shape, lambda i, _n=len(shape): (0,) * _n)


# ================= kernel 1: lm_head + CE(nll) + FGSM perturbation ===========
def _lm_ce_adv_kernel(dec_ref, lab_ref, w_ref, wt_ref,
                      probs_ref, pert_ref, nll_ref, *, scale, eps):
    """Fused: scaled lm_head matmul, token-mean CE (ignore_index=-100) reduced
    to a scalar in-kernel, softmax probs output (consumed as true_probs later),
    and the analytic FGSM perturbation of generate_adv."""
    seq = dec_ref[...] * scale                                        # (N, H) f32
    logits = jnp.dot(seq.astype(jnp.bfloat16), w_ref[...],
                     preferred_element_type=jnp.float32)              # (N, V) f32

    m = jnp.max(logits, axis=-1, keepdims=True)
    e = jnp.exp(logits - m)
    sum_e = jnp.sum(e, axis=-1, keepdims=True)
    probs = e / sum_e                                                 # exact division
    probs_ref[...] = probs

    labs = lab_ref[...]                                               # (N, 1) int32
    is_label = jax.lax.broadcasted_iota(jnp.int32, logits.shape, 1) == labs  # bool
    label_logit = jnp.sum(jnp.where(is_label, logits, 0.0), axis=-1, keepdims=True)
    valid = (labs != IGNORE).astype(jnp.float32)                      # (N, 1)
    n_valid = jnp.sum(valid)
    inv_n = 1.0 / jnp.maximum(n_valid, 1.0)                           # guarded
    lse = m + jnp.log(sum_e)
    nll_ref[0] = jnp.sum((lse - label_logit) * valid) * inv_n

    # analytic d(mean CE)/d(seq), then l2-normalised FGSM step (== loss.backward()).
    grad_logits = jnp.where(is_label, probs - 1.0, probs) * (valid * inv_n)  # (N, V)
    grad_h = jnp.dot(grad_logits.astype(jnp.bfloat16), wt_ref[...],
                     preferred_element_type=jnp.float32)              # (N, H)
    l2 = jnp.sqrt(jnp.sum(grad_h * grad_h, axis=-1, keepdims=True))
    pert_ref[...] = seq + eps * grad_h / (l2 + 1e-12)


def lm_ce_adv_call(dec_flat, lab_flat, w_lm_bf16, w_lm_T_bf16, *, scale, neg_eps):
    N, Hh = dec_flat.shape
    Vv = w_lm_bf16.shape[1]
    kernel = functools.partial(_lm_ce_adv_kernel, scale=scale, eps=neg_eps)
    return pl.pallas_call(
        kernel,
        grid=(1,),
        in_specs=[_full_spec((N, Hh)),
                  _full_spec((N, 1)),
                  _full_spec((Hh, Vv)),
                  _full_spec((Vv, Hh))],
        out_specs=(_full_spec((N, Vv)),
                   _full_spec((N, Hh)),
                   pl.BlockSpec(memory_space=pltpu.MemorySpace.SMEM)),
        out_shape=(jax.ShapeDtypeStruct((N, Vv), jnp.float32),   # softmax probs
                   jax.ShapeDtypeStruct((N, Hh), jnp.float32),   # perturbed_dec
                   jax.ShapeDtypeStruct((1,), jnp.float32)),     # nll
        compiler_params=pltpu.CompilerParams(dimension_semantics=("arbitrary",)),
    )(dec_flat, lab_flat, w_lm_bf16, w_lm_T_bf16)


# ====== kernel 2: generate_cont_adv (analytic) + pooling + contrastive loss ===
def _cont_loss_kernel(enc_ref, encm_ref, dec_ref, decm_ref, decmf_ref,
                      pert_ref, probs_ref,
                      wp_ref, bp_ref, wpt_ref, wlm_ref, wlmt_ref,
                      loss_ref, *, scale, tau, eps):
    Bb, Se, Hh = enc_ref.shape
    Sd = dec_ref.shape[1]
    N = Bb * Sd

    wp = wp_ref[...]                                                  # (H,H) bf16
    bp = bp_ref[...]                                                  # (1,H) f32

    def proj_relu(x2d):                                               # (M,H)->(M,H)
        return jnp.maximum(
            jnp.dot(x2d.astype(jnp.bfloat16), wp,
                    preferred_element_type=jnp.float32) + bp, 0.0)

    # ---- avg_doc: projection + masked avg-pool of encoder hidden states ----
    enc_mask = encm_ref[...]                                          # (B,Se) f32
    len_e = jnp.maximum(jnp.sum(enc_mask, axis=1, keepdims=True), 1.0)       # (B,1)
    proj_e = proj_relu(enc_ref[...].reshape(Bb * Se, Hh)).reshape(Bb, Se, Hh)
    avg_doc = jnp.sum(proj_e * enc_mask[..., None], axis=1) / len_e           # (B,H)

    # ---- avg_abs: projection (keep relu mask for backward) + pool of seq ----
    dec_mask = decm_ref[...]                                          # (B,Sd) f32
    md = dec_mask[..., None]                                          # (B,Sd,1)
    len_d = jnp.maximum(jnp.sum(dec_mask, axis=1, keepdims=True), 1.0)        # (B,1)
    seq = dec_ref[...] * scale                                        # (B,Sd,H)
    pre_d = jnp.dot(seq.reshape(N, Hh).astype(jnp.bfloat16), wp,
                    preferred_element_type=jnp.float32) + bp          # (N,H)
    relu_d = pre_d > 0.0
    proj_d = jnp.where(relu_d, pre_d, 0.0).reshape(Bb, Sd, Hh)
    avg_abs = jnp.sum(proj_d * md, axis=1) / len_d                    # (B,H)

    # ---- cosine similarity matrix sim[i,j] = cos(avg_doc[i], avg_abs[j]) ----
    n_doc = jnp.maximum(jnp.sqrt(jnp.sum(avg_doc * avg_doc, axis=-1, keepdims=True)), 1e-8)
    n_abs = jnp.maximum(jnp.sqrt(jnp.sum(avg_abs * avg_abs, axis=-1, keepdims=True)), 1e-8)
    u_doc = avg_doc / n_doc                                           # (B,H)
    u_abs = avg_abs / n_abs                                           # (B,H)
    sim_matrix = jnp.sum(u_doc[:, None, :] * u_abs[None, :, :], axis=-1)      # (B,B)

    eye_b = (jax.lax.broadcasted_iota(jnp.int32, (Bb, Bb), 0)
             == jax.lax.broadcasted_iota(jnp.int32, (Bb, Bb), 1))
    eye_f = eye_b.astype(jnp.float32)

    # ---- generate_cont_adv step 1: analytic grad of contrastive CE wrt seq ----
    lg = sim_matrix * (1.0 / tau)
    lg_m = jnp.max(lg, axis=-1, keepdims=True)
    lg_e = jnp.exp(lg - lg_m)
    lg_p = lg_e / jnp.sum(lg_e, axis=-1, keepdims=True)               # row softmax
    dlg = (lg_p - eye_f) * (1.0 / Bb)                                 # dL/d lg[i,j]

    # d lg[i,j]/d avg_abs[j] = (u_doc[i] - sim[i,j]*u_abs[j]) / (tau*|avg_abs[j]|)
    g_avg = jnp.sum(dlg[:, :, None] *
                    (u_doc[:, None, :] - sim_matrix[:, :, None] * u_abs[None, :, :]),
                    axis=0) / (tau * n_abs)                           # (B,H)

    # back through masked avg-pool, ReLU and the projection Linear
    g_pre = jnp.where(relu_d,
                      ((md / len_d[:, :, None]) * g_avg[:, None, :]).reshape(N, Hh),
                      0.0)                                            # (N,H)
    dec_grad = jnp.dot(g_pre.astype(jnp.bfloat16), wpt_ref[...],
                       preferred_element_type=jnp.float32)            # (N,H)
    g_l2 = jnp.sqrt(jnp.sum(dec_grad * dec_grad, axis=-1, keepdims=True))
    pert1 = seq.reshape(N, Hh) + eps * dec_grad / (g_l2 + 1e-12)      # (N,H)

    # ---- generate_cont_adv step 2: analytic KL grad through lm_head ----
    plog = jnp.dot(pert1.astype(jnp.bfloat16), wlm_ref[...],
                   preferred_element_type=jnp.float32)                # (N,V)
    p_m = jnp.max(plog, axis=-1, keepdims=True)
    p_e = jnp.exp(plog - p_m)
    psm = p_e / jnp.sum(p_e, axis=-1, keepdims=True)                  # softmax(perturb_logits)
    mflat = decmf_ref[...]                                            # (N,1)
    denom = jnp.maximum(jnp.sum(dec_mask), 1.0)
    grad_plog = mflat * (psm - probs_ref[...]) * (1.0 / denom)        # (N,V)
    kl_grad = jnp.dot(grad_plog.astype(jnp.bfloat16), wlmt_ref[...],
                      preferred_element_type=jnp.float32)             # (N,H)
    k_l2 = jnp.sqrt(jnp.sum(kl_grad * kl_grad, axis=-1, keepdims=True))
    pos_dec = pert1 - eps * kl_grad / (k_l2 + 1e-12)                  # (N,H)

    # ---- avg_pert / avg_pos_dec: projection + masked avg-pool ----
    proj_p = proj_relu(pert_ref[...]).reshape(Bb, Sd, Hh)
    avg_pert = jnp.sum(proj_p * md, axis=1) / len_d                   # (B,H)
    proj_q = proj_relu(pos_dec).reshape(Bb, Sd, Hh)
    avg_pos = jnp.sum(proj_q * md, axis=1) / len_d                    # (B,H)

    n_pert = jnp.maximum(jnp.sqrt(jnp.sum(avg_pert * avg_pert, axis=-1, keepdims=True)), 1e-8)
    n_pos = jnp.maximum(jnp.sqrt(jnp.sum(avg_pos * avg_pos, axis=-1, keepdims=True)), 1e-8)
    adv_sim = jnp.sum(u_doc * (avg_pert / n_pert), axis=-1, keepdims=True)    # (B,1)
    pos_sim = jnp.sum(u_doc * (avg_pos / n_pos), axis=-1, keepdims=True)      # (B,1)

    # ---- contrastive CE epilogue (logsumexp over [sim row | adv_sim]) ----
    def ce_mean(mat, extra, label_logit):
        m = jnp.maximum(jnp.max(mat, axis=-1, keepdims=True), extra)          # (B,1)
        se = jnp.sum(jnp.exp(mat - m), axis=-1, keepdims=True) + jnp.exp(extra - m)
        lse = m + jnp.log(se)
        return jnp.sum(lse - label_logit) * (1.0 / Bb)

    diag_sim = jnp.sum(eye_f * sim_matrix, axis=-1, keepdims=True)            # (B,1)
    inv_tau = 1.0 / tau
    loss1 = ce_mean(sim_matrix * inv_tau, adv_sim * inv_tau, diag_sim * inv_tau)
    new_sim = jnp.where(eye_b, pos_sim, sim_matrix)                           # (B,B)
    loss2 = ce_mean(new_sim, adv_sim, pos_sim)          # note: no tau (matches spec)
    loss_ref[0] = 0.5 * (loss1 + loss2)


def cont_loss_call(enc_h, enc_m, dec_h, dec_m, dec_m_flat, pert_flat, probs_flat,
                   w_proj_bf16, b_proj_2d, w_proj_T_bf16, w_lm_bf16, w_lm_T_bf16,
                   *, scale, tau, pos_eps):
    Bb, Se, Hh = enc_h.shape
    Sd = dec_h.shape[1]
    N, Vv = probs_flat.shape
    kernel = functools.partial(_cont_loss_kernel, scale=scale, tau=tau, eps=pos_eps)
    return pl.pallas_call(
        kernel,
        grid=(1,),
        in_specs=[_full_spec((Bb, Se, Hh)),
                  _full_spec((Bb, Se)),
                  _full_spec((Bb, Sd, Hh)),
                  _full_spec((Bb, Sd)),
                  _full_spec((N, 1)),
                  _full_spec((N, Hh)),
                  _full_spec((N, Vv)),
                  _full_spec((Hh, Hh)),
                  _full_spec((1, Hh)),
                  _full_spec((Hh, Hh)),
                  _full_spec((Hh, Vv)),
                  _full_spec((Vv, Hh))],
        out_specs=pl.BlockSpec(memory_space=pltpu.MemorySpace.SMEM),
        out_shape=jax.ShapeDtypeStruct((1,), jnp.float32),
        compiler_params=pltpu.CompilerParams(dimension_semantics=("arbitrary",)),
    )(enc_h, enc_m, dec_h, dec_m, dec_m_flat, pert_flat, probs_flat,
      w_proj_bf16, b_proj_2d, w_proj_T_bf16, w_lm_bf16, w_lm_T_bf16)


# ----------------------------- forward (jitted) -------------------------------
@functools.partial(jax.jit,
                   static_argnames=("adv", "tau", "neg_eps", "pos_eps", "model_dim"))
def adv_t5_forward(params, enc_hidden_states, attention_mask, dec_hidden_states,
                   decoder_attention_mask, lm_labels, *, adv, tau, neg_eps,
                   pos_eps, model_dim):
    Bb, Sd, Hh = dec_hidden_states.shape
    N = Bb * Sd
    scale = model_dim ** (-0.5)

    dec_flat = dec_hidden_states.reshape(N, Hh)
    lab_flat = lm_labels.reshape(N, 1).astype(jnp.int32)

    # kernel 1: lm_head + CE + FGSM perturbation (single dispatch, nll in-kernel)
    probs_flat, pert_flat, nll_v = lm_ce_adv_call(
        dec_flat, lab_flat, params["w_lm_bf16"], params["w_lm_T_bf16"],
        scale=scale, neg_eps=neg_eps)
    nll = nll_v[0]
    if not adv:
        return nll

    enc_mask_f = attention_mask.astype(jnp.float32)
    dec_mask_f = decoder_attention_mask.astype(jnp.float32)
    dec_mask_flat = dec_mask_f.reshape(N, 1)

    # kernel 2: generate_cont_adv (both backward passes analytic) + all four
    # projection/pool paths + cosine-sim epilogue + both CE terms -> one scalar
    cont_v = cont_loss_call(
        enc_hidden_states, enc_mask_f, dec_hidden_states, dec_mask_f,
        dec_mask_flat, pert_flat, probs_flat,
        params["w_proj_bf16"], params["b_proj_2d"], params["w_proj_T_bf16"],
        params["w_lm_bf16"], params["w_lm_T_bf16"],
        scale=scale, tau=tau, pos_eps=pos_eps)
    return nll, cont_v[0]


# ----------------------------- module wrapper --------------------------------
class AdvContrastiveT5Pallas:
    def __init__(self, params, tau, neg_eps, pos_eps, model_dim):
        # bf16 copies for the MXU (halved weight DMA; f32 accumulation in-kernel)
        self.params = {
            "w_lm_bf16": params["w_lm"].astype(jnp.bfloat16),
            "w_lm_T_bf16": params["w_lm"].T.astype(jnp.bfloat16),
            "w_proj_bf16": params["w_proj"].astype(jnp.bfloat16),
            "w_proj_T_bf16": params["w_proj"].T.astype(jnp.bfloat16),
            "b_proj_2d": params["b_proj"].reshape(1, -1).astype(jnp.float32),
        }
        self.tau = float(tau)
        self.neg_eps = float(neg_eps)
        self.pos_eps = float(pos_eps)
        self.model_dim = int(model_dim)

    def forward(self, enc_hidden_states, attention_mask, dec_hidden_states,
                decoder_attention_mask, lm_labels, adv=False):
        return adv_t5_forward(self.params, enc_hidden_states, attention_mask,
                              dec_hidden_states, decoder_attention_mask,
                              lm_labels, adv=adv, tau=self.tau,
                              neg_eps=self.neg_eps, pos_eps=self.pos_eps,
                              model_dim=self.model_dim)


# ----------------------------- main ------------------------------------------
if __name__ == "__main__":
    key = jax.random.PRNGKey(0)
    k_lm, k_wp, k_bp, k_enc, k_dec, k_lab = jax.random.split(key, 6)

    # deterministic synthetic parameters (shapes implied by the module)
    w_lm = (jax.random.normal(k_lm, (H, V)) * 0.02).astype(jnp.float32)
    w_proj = (jax.random.normal(k_wp, (H, H)) * 0.02).astype(jnp.float32)
    b_proj = (jax.random.normal(k_bp, (H,)) * 0.02).astype(jnp.float32)
    params = {"w_lm": w_lm, "w_proj": w_proj, "b_proj": b_proj}

    # synthetic encoder / decoder outputs (stand-ins for the T5 stacks)
    enc_hidden_states = jax.random.normal(k_enc, (B, S_ENC, H), jnp.float32)
    dec_hidden_states = jax.random.normal(k_dec, (B, S_DEC, H), jnp.float32)

    attention_mask = jnp.array(
        [[1] * S_ENC, [1] * (S_ENC - 4) + [0] * 4], dtype=jnp.int32)
    decoder_attention_mask = jnp.array(
        [[1] * S_DEC, [1] * (S_DEC - 2) + [0] * 2], dtype=jnp.int32)
    lm_labels = jax.random.randint(k_lab, (B, S_DEC), 0, V, dtype=jnp.int32)
    lm_labels = jnp.where(decoder_attention_mask == 0, IGNORE, lm_labels)

    model = AdvContrastiveT5Pallas(params, tau=TAU, neg_eps=NEG_EPS,
                                   pos_eps=POS_EPS, model_dim=H)

    nll_only = model.forward(enc_hidden_states, attention_mask,
                             dec_hidden_states, decoder_attention_mask,
                             lm_labels, adv=False)
    nll, cont_loss = model.forward(enc_hidden_states, attention_mask,
                                   dec_hidden_states, decoder_attention_mask,
                                   lm_labels, adv=True)

    jax.block_until_ready((nll_only, nll, cont_loss))
    assert bool(jnp.isfinite(nll_only)) and bool(jnp.isfinite(nll)) \
        and bool(jnp.isfinite(cont_loss))
    print("KERNEL_OK")
</pallas_src>

<mosaic_0001>
module attributes {stable_mosaic.version = 11 : i64} {
  func.func @_lm_ce_adv_kernel(%arg0: i32, %arg1: memref<16x128xf32, #tpu.memory_space<vmem>>, %arg2: memref<16x1xi32, #tpu.memory_space<vmem>>, %arg3: memref<128x512xbf16, #tpu.memory_space<vmem>>, %arg4: memref<512x128xbf16, #tpu.memory_space<vmem>>, %arg5: memref<16x512xf32, #tpu.memory_space<vmem>>, %arg6: memref<16x128xf32, #tpu.memory_space<vmem>>, %arg7: memref<1xf32, #tpu.memory_space<smem>>) attributes {dimension_semantics = [#tpu.dimension_semantics<arbitrary>], iteration_bounds = array<i64: 1>, scalar_prefetch = 0 : i64, scratch_operands = 0 : i64, tpu.core_type = #tpu.core_type<tc>, window_params = [{pipeline_mode = #tpu.pipeline_mode<synchronous>, transform_indices = @transform_0, window_bounds = array<i64: 16, 128>}, {pipeline_mode = #tpu.pipeline_mode<synchronous>, transform_indices = @transform_1, window_bounds = array<i64: 16, 1>}, {pipeline_mode = #tpu.pipeline_mode<synchronous>, transform_indices = @transform_2, window_bounds = array<i64: 128, 512>}, {pipeline_mode = #tpu.pipeline_mode<synchronous>, transform_indices = @transform_3, window_bounds = array<i64: 512, 128>}, {pipeline_mode = #tpu.pipeline_mode<synchronous>, transform_indices = @transform_4, window_bounds = array<i64: 16, 512>}, {pipeline_mode = #tpu.pipeline_mode<synchronous>, transform_indices = @transform_5, window_bounds = array<i64: 16, 128>}, {transform_indices = @transform_6, window_bounds = array<i64: 1>}]} {
    %c0 = arith.constant 0 : index
    %c0_0 = arith.constant 0 : index
    %0 = vector.load %arg1[%c0, %c0_0] : memref<16x128xf32, #tpu.memory_space<vmem>>, vector<16x128xf32>
    %cst = arith.constant 0.0883883461 : f32
    %1 = vector.broadcast %cst : f32 to vector<16x128xf32>
    %2 = arith.mulf %0, %1 : vector<16x128xf32>
    %3 = arith.truncf %2 : vector<16x128xf32> to vector<16x128xbf16>
    %c0_1 = arith.constant 0 : index
    %c0_2 = arith.constant 0 : index
    %4 = vector.load %arg3[%c0_1, %c0_2] : memref<128x512xbf16, #tpu.memory_space<vmem>>, vector<128x512xbf16>
    %cst_3 = arith.constant dense<0.000000e+00> : vector<16x512xf32>
    %5 = tpu.matmul %3, %4, %cst_3 {dimension_numbers = #tpu.dot_dimension_numbers<[1], [0], [0], [1], [0, 0, 1, 1], [], []>} : vector<16x128xbf16>, vector<128x512xbf16>, vector<16x512xf32> -> vector<16x512xf32>
    %cst_4 = arith.constant dense<0xFF800000> : vector<16xf32>
    %6 = vector.multi_reduction <maximumf>, %5, %cst_4 [1] : vector<16x512xf32> to vector<16xf32>
    %7 = vector.shape_cast %6 : vector<16xf32> to vector<16x1xf32>
    %8 = vector.broadcast %7 : vector<16x1xf32> to vector<16x512xf32>
    %9 = arith.subf %5, %8 : vector<16x512xf32>
    %10 = math.exp %9 : vector<16x512xf32>
    %cst_5 = arith.constant dense<0.000000e+00> : vector<16xf32>
    %11 = vector.multi_reduction <add>, %10, %cst_5 [1] : vector<16x512xf32> to vector<16xf32>
    %12 = vector.shape_cast %11 : vector<16xf32> to vector<16x1xf32>
    %13 = vector.broadcast %12 : vector<16x1xf32> to vector<16x512xf32>
    %14 = arith.divf %10, %13 : vector<16x512xf32>
    %c0_6 = arith.constant 0 : index
    %c0_7 = arith.constant 0 : index
    %15 = vector.load %arg5[%c0_6, %c0_7] : memref<16x512xf32, #tpu.memory_space<vmem>>, vector<16x512xf32>
    tpu.vector_store %arg5[%c0_6, %c0_7], %14 {strides = array<i32>} : memref<16x512xf32, #tpu.memory_space<vmem>>, vector<16x512xf32>,
    %c0_8 = arith.constant 0 : index
    %c0_9 = arith.constant 0 : index
    %16 = vector.load %arg2[%c0_8, %c0_9] : memref<16x1xi32, #tpu.memory_space<vmem>>, vector<16x1xi32>
    %17 = tpu.iota {dimensions = array<i32: 1>} : vector<16x512xi32>
    %18 = vector.broadcast %16 : vector<16x1xi32> to vector<16x512xi32>
    %19 = arith.cmpi eq, %17, %18 : vector<16x512xi32>
    %cst_10 = arith.constant 0.000000e+00 : f32
    %20 = vector.broadcast %cst_10 : f32 to vector<16x512xf32>
    %21 = arith.select %19, %5, %20 : vector<16x512xi1>, vector<16x512xf32>
    %cst_11 = arith.constant dense<0.000000e+00> : vector<16xf32>
    %22 = vector.multi_reduction <add>, %21, %cst_11 [1] : vector<16x512xf32> to vector<16xf32>
    %23 = vector.shape_cast %22 : vector<16xf32> to vector<16x1xf32>
    %c-100_i32 = arith.constant -100 : i32
    %24 = vector.broadcast %c-100_i32 : i32 to vector<16x1xi32>
    %25 = arith.cmpi ne, %16, %24 : vector<16x1xi32>
    %26 = arith.extui %25 : vector<16x1xi1> to vector<16x1xi32>
    %27 = arith.sitofp %26 : vector<16x1xi32> to vector<16x1xf32>
    %28 = vector.shape_cast %27 : vector<16x1xf32> to vector<1x16x1xf32>
    %cst_12 = arith.constant dense<0.000000e+00> : vector<1xf32>
    %29 = vector.multi_reduction <add>, %28, %cst_12 [1, 2] : vector<1x16x1xf32> to vector<1xf32>
    %30 = vector.shape_cast %29 : vector<1xf32> to vector<1x1x1xf32>
    %31 = vector.extract %30[0, 0, 0] : f32 from vector<1x1x1xf32>
    %cst_13 = arith.constant 1.000000e+00 : f32
    %32 = arith.maximumf %31, %cst_13 : f32
    %cst_14 = arith.constant 1.000000e+00 : f32
    %33 = arith.divf %cst_14, %32 : f32
    %34 = math.log %12 : vector<16x1xf32>
    %35 = arith.addf %7, %34 : vector<16x1xf32>
    %36 = arith.subf %35, %23 : vector<16x1xf32>
    %37 = arith.mulf %36, %27 : vector<16x1xf32>
    %38 = vector.shape_cast %37 : vector<16x1xf32> to vector<1x16x1xf32>
    %cst_15 = arith.constant dense<0.000000e+00> : vector<1xf32>
    %39 = vector.multi_reduction <add>, %38, %cst_15 [1, 2] : vector<1x16x1xf32> to vector<1xf32>
    %40 = vector.shape_cast %39 : vector<1xf32> to vector<1x1x1xf32>
    %41 = vector.extract %40[0, 0, 0] : f32 from vector<1x1x1xf32>
    %42 = arith.mulf %41, %33 : f32
    %c0_16 = arith.constant 0 : index
    %43 = memref.load %arg7[%c0_16] : memref<1xf32, #tpu.memory_space<smem>>
    memref.store %42, %arg7[%c0_16] : memref<1xf32, #tpu.memory_space<smem>>
    %cst_17 = arith.constant 1.000000e+00 : f32
    %44 = vector.broadcast %cst_17 : f32 to vector<16x512xf32>
    %45 = arith.subf %14, %44 : vector<16x512xf32>
    %46 = arith.select %19, %45, %14 : vector<16x512xi1>, vector<16x512xf32>
    %47 = vector.broadcast %33 : f32 to vector<16x1xf32>
    %48 = arith.mulf %27, %47 : vector<16x1xf32>
    %49 = vector.broadcast %48 : vector<16x1xf32> to vector<16x512xf32>
    %50 = arith.mulf %46, %49 : vector<16x512xf32>
    %51 = arith.truncf %50 : vector<16x512xf32> to vector<16x512xbf16>
    %c0_18 = arith.constant 0 : index
    %c0_19 = arith.constant 0 : index
    %52 = vector.load %arg4[%c0_18, %c0_19] : memref<512x128xbf16, #tpu.memory_space<vmem>>, vector<512x128xbf16>
    %cst_20 = arith.constant dense<0.000000e+00> : vector<16x128xf32>
    %53 = tpu.matmul %51, %52, %cst_20 {dimension_numbers = #tpu.dot_dimension_numbers<[1], [0], [0], [1], [0, 0, 1, 1], [], []>} : vector<16x512xbf16>, vector<512x128xbf16>, vector<16x128xf32> -> vector<16x128xf32>
    %54 = arith.mulf %53, %53 : vector<16x128xf32>
    %cst_21 = arith.constant dense<0.000000e+00> : vector<16xf32>
    %55 = vector.multi_reduction <add>, %54, %cst_21 [1] : vector<16x128xf32> to vector<16xf32>
    %56 = vector.shape_cast %55 : vector<16xf32> to vector<16x1xf32>
    %57 = math.sqrt %56 : vector<16x1xf32>
    %cst_22 = arith.constant 1.000000e+00 : f32
    %58 = vector.broadcast %cst_22 : f32 to vector<16x128xf32>
    %59 = arith.mulf %58, %53 : vector<16x128xf32>
    %cst_23 = arith.constant 9.99999996E-13 : f32
    %60 = vector.broadcast %cst_23 : f32 to vector<16x1xf32>
    %61 = arith.addf %57, %60 : vector<16x1xf32>
    %62 = vector.broadcast %61 : vector<16x1xf32> to vector<16x128xf32>
    %63 = arith.divf %59, %62 : vector<16x128xf32>
    %64 = arith.addf %2, %63 : vector<16x128xf32>
    %c0_24 = arith.constant 0 : index
    %c0_25 = arith.constant 0 : index
    %65 = vector.load %arg6[%c0_24, %c0_25] : memref<16x128xf32, #tpu.memory_space<vmem>>, vector<16x128xf32>
    tpu.vector_store %arg6[%c0_24, %c0_25], %64 {strides = array<i32>} : memref<16x128xf32, #tpu.memory_space<vmem>>, vector<16x128xf32>,
    return
  }
  func.func @transform_0(%arg0: i32) -> (i32, i32) {
    %c0_i32 = arith.constant 0 : i32
    %c0_i32_0 = arith.constant 0 : i32
    %c0_i32_1 = arith.constant 0 : i32
    return %c0_i32, %c0_i32_0 : i32, i32
  }
  func.func @transform_1(%arg0: i32) -> (i32, i32) {
    %c0_i32 = arith.constant 0 : i32
    %c0_i32_0 = arith.constant 0 : i32
    %c0_i32_1 = arith.constant 0 : i32
    return %c0_i32, %c0_i32_0 : i32, i32
  }
  func.func @transform_2(%arg0: i32) -> (i32, i32) {
    %c0_i32 = arith.constant 0 : i32
    %c0_i32_0 = arith.constant 0 : i32
    %c0_i32_1 = arith.constant 0 : i32
    return %c0_i32, %c0_i32_0 : i32, i32
  }
  func.func @transform_3(%arg0: i32) -> (i32, i32) {
    %c0_i32 = arith.constant 0 : i32
    %c0_i32_0 = arith.constant 0 : i32
    %c0_i32_1 = arith.constant 0 : i32
    return %c0_i32, %c0_i32_0 : i32, i32
  }
  func.func @transform_4(%arg0: i32) -> (i32, i32) {
    %c0_i32 = arith.constant 0 : i32
    %c0_i32_0 = arith.constant 0 : i32
    %c0_i32_1 = arith.constant 0 : i32
    return %c0_i32, %c0_i32_0 : i32, i32
  }
  func.func @transform_5(%arg0: i32) -> (i32, i32) {
    %c0_i32 = arith.constant 0 : i32
    %c0_i32_0 = arith.constant 0 : i32
    %c0_i32_1 = arith.constant 0 : i32
    return %c0_i32, %c0_i32_0 : i32, i32
  }
  func.func @transform_6(%arg0: i32) -> i32 {
    %c0_i32 = arith.constant 0 : i32
    %c0_i32_0 = arith.constant 0 : i32
    return %c0_i32 : i32
  }
}

</mosaic_0001>

<llo_original>
// kernel: adv_t5_forward.1
$region0: #{adv_t5_forward.1}
  #allocation0 [shape = 'u32[]', space=smem, size = 0x4, offset = 0x4, fixed_abs, tag = 'smem constant byte address 0x4 - core index']
  #allocation1 [shape = 'u32[144,128]{1,0:T(1,128)}', space=vmem, size = 0x12000, scoped, tag = 'internal scratch']
  %s0 = inlined_call_operand.vmem [shape: f32[16,128], index: 0, kind: input, shape index: {}]
  %s1 = inlined_call_operand.vmem [shape: s32[16,1], index: 1, kind: input, shape index: {}]
  %s2 = inlined_call_operand.hbm [shape: bf16[128,512], index: 2, kind: input, shape index: {}]
  %s3 = inlined_call_operand.hbm [shape: bf16[512,128], index: 3, kind: input, shape index: {}]
  %s4 = inlined_call_operand.hbm [shape: f32[16,512], index: 4, kind: output, shape index: {0}]
  %s5 = inlined_call_operand.hbm [shape: f32[16,128], index: 5, kind: output, shape index: {1}]
  %s6 = inlined_call_operand.hbm [shape: f32[1], index: 6, kind: output, shape index: {2}]
  %7 = xla_tuple %s4, %s5, %s6
  %s8 = sld [smem:[#allocation0]]
  $region50: #{adv_t5_forward.1} parent=0
    _
  %s10 = ssub.s32 1, %s8
  %s11 = scalar_select 0, %s10, %s8
  $region1: #{adv_t5_forward.1} parent=0
    #allocation2 [shape = 'u8[131072]{0}', space=vmem, size = 0x20000, scoped, tag = 'input window, operand 2, single buffered']
    #allocation3 [shape = 's32[1]{0}', space=sflag, size = 0x4, scoped, tag = 'scoped memory for adv_t5_forward.1']
    #allocation4 [shape = 's32[1]{0}', space=sflag, size = 0x4, scoped, tag = 'scoped memory for adv_t5_forward.1']
    #allocation5 [shape = 's32[1]{0}', space=sflag, size = 0x4, scoped, tag = 'scoped memory for adv_t5_forward.1']
    #allocation6 [shape = 'u8[131072]{0}', space=vmem, size = 0x20000, scoped, tag = 'input window, operand 3, single buffered']
    #allocation7 [shape = 's32[1]{0}', space=sflag, size = 0x4, scoped, tag = 'scoped memory for adv_t5_forward.1']
    #allocation8 [shape = 'u8[32768]{0}', space=vmem, size = 0x8000, scoped, tag = 'output window, operand 0, single buffered']
    #allocation9 [shape = 'u8[8192]{0}', space=vmem, size = 0x2000, scoped, tag = 'output window, operand 1, single buffered']
    #allocation10 [shape = 's32[1]{0}', space=sflag, size = 0x4, scoped, tag = 'scoped memory for adv_t5_forward.1']
    #allocation11 [shape = 'u8[512]{0}', space=smem, size = 0x200, scoped, tag = 'output window, operand 2, single buffered']
    %12 = vsyncpa [#allocation3], 0
    %13 = vsyncpa [#allocation7], 0
    %14 = vsyncpa [#allocation4], 0
    %15 = vsyncpa [#allocation10], 0
    %16 = vsyncpa [#allocation5], 0
    // Predicated region
    $region2: #{adv_t5_forward.1} parent=1 // pred_check
      _
    $region3: #{adv_t5_forward.1} parent=1 // pred_check_branch
      %18 = sbr.rel (0) target = $region5
    $region4: #{adv_t5_forward.1} parent=1 // pred_region
      _
    $region5: #{adv_t5_forward.1} parent=1 // pred_fallthru
      _
    // Predicated region
    $region6: #{adv_t5_forward.1} parent=1 // pred_check
      _
    $region7: #{adv_t5_forward.1} parent=1 // pred_check_branch
      %20 = sbr.rel (0) target = $region9
    $region8: #{adv_t5_forward.1} parent=1 // pred_region
      _
    $region9: #{adv_t5_forward.1} parent=1 // pred_fallthru
      _
    // Predicated region
    $region10: #{adv_t5_forward.1} parent=1 // pred_check
      _
    $region11: #{adv_t5_forward.1} parent=1 // pred_check_branch
      %22 = sbr.rel (0) target = $region13
    $region12: #{adv_t5_forward.1} parent=1 // pred_region
      %s24 = ssub.s32 4096, 4096
      %25 = vsyncadd [#allocation3], %s24
      %s26 = sshll.u32 [#allocation2], 4
      %s27 = int_to_ptr.vmem [resolvable:$true] %s26
      %32 = dma.hbm_to_vmem [thread:$0]  %s2, 4096, %s27, [#allocation3], 256, 256, 16
    $region13: #{adv_t5_forward.1} parent=1 // pred_fallthru
      _
    // Predicated region
    $region14: #{adv_t5_forward.1} parent=1 // pred_check
      _
    $region15: #{adv_t5_forward.1} parent=1 // pred_check_branch
      %34 = sbr.rel (0) target = $region17
    $region16: #{adv_t5_forward.1} parent=1 // pred_region
      %s36 = ssub.s32 4096, 4096
      %37 = vsyncadd [#allocation7], %s36
      %s38 = sshll.u32 [#allocation6], 4
      %s39 = int_to_ptr.vmem [resolvable:$true] %s38
      %44 = dma.hbm_to_vmem [thread:$0]  %s3, 4096, %s39, [#allocation7], 64, 64, 4
    $region17: #{adv_t5_forward.1} parent=1 // pred_fallthru
      _
    // Predicated region
    $region18: #{adv_t5_forward.1} parent=1 // pred_check
      _
    $region19: #{adv_t5_forward.1} parent=1 // pred_check_branch
      %46 = sbr.rel (0) target = $region21
    $region20: #{adv_t5_forward.1} parent=1 // pred_region
      %47 = dma.done [#allocation3], 4096
    $region21: #{adv_t5_forward.1} parent=1 // pred_fallthru
      _
    // Predicated region
    $region22: #{adv_t5_forward.1} parent=1 // pred_check
      _
    $region23: #{adv_t5_forward.1} parent=1 // pred_check_branch
      %49 = sbr.rel (0) target = $region25
    $region24: #{adv_t5_forward.1} parent=1 // pred_region
      %50 = dma.done [#allocation7], 4096
    $region25: #{adv_t5_forward.1} parent=1 // pred_fallthru
      _
    %v52 = vld [vmem:[%s0] sm:$0xff]
    %v53 = vld [vmem:[%s0 + $0x8] sm:$0xff]
    %v54 = vmul.f32 %v52, 0.088388346
    %v55 = vmul.f32 %v53, 0.088388346
    %v56 = vpack.c.bf16 %v55, %v54
    %v57 = vld [vmem:[#allocation2] sm:$0xff]
    %v58 = vld [vmem:[#allocation2 + $0x8] sm:$0xff]
    %v59 = vld [vmem:[#allocation2 + $0x10] sm:$0xff]
    %v60 = vld [vmem:[#allocation2 + $0x18] sm:$0xff]
    %v61 = vld [vmem:[#allocation2 + $0x20] sm:$0xff]
    %v62 = vld [vmem:[#allocation2 + $0x28] sm:$0xff]
    %v63 = vld [vmem:[#allocation2 + $0x30] sm:$0xff]
    %v64 = vld [vmem:[#allocation2 + $0x38] sm:$0xff]
    %v65 = vld [vmem:[#allocation2 + $0x40] sm:$0xff]
    %v66 = vld [vmem:[#allocation2 + $0x48] sm:$0xff]
    %v67 = vld [vmem:[#allocation2 + $0x50] sm:$0xff]
    %v68 = vld [vmem:[#allocation2 + $0x58] sm:$0xff]
    %v69 = vld [vmem:[#allocation2 + $0x60] sm:$0xff]
    %v70 = vld [vmem:[#allocation2 + $0x68] sm:$0xff]
    %v71 = vld [vmem:[#allocation2 + $0x70] sm:$0xff]
    %v72 = vld [vmem:[#allocation2 + $0x78] sm:$0xff]
    %v73 = vld [vmem:[#allocation2 + $0x80] sm:$0xff]
    %v74 = vld [vmem:[#allocation2 + $0x88] sm:$0xff]
    %v75 = vld [vmem:[#allocation2 + $0x90] sm:$0xff]
    %v76 = vld [vmem:[#allocation2 + $0x98] sm:$0xff]
    %v77 = vld [vmem:[#allocation2 + $0xa0] sm:$0xff]
    %v78 = vld [vmem:[#allocation2 + $0xa8] sm:$0xff]
    %v79 = vld [vmem:[#allocation2 + $0xb0] sm:$0xff]
    %v80 = vld [vmem:[#allocation2 + $0xb8] sm:$0xff]
    %v81 = vld [vmem:[#allocation2 + $0xc0] sm:$0xff]
    %v82 = vld [vmem:[#allocation2 + $0xc8] sm:$0xff]
    %v83 = vld [vmem:[#allocation2 + $0xd0] sm:$0xff]
    %v84 = vld [vmem:[#allocation2 + $0xd8] sm:$0xff]
    %v85 = vld [vmem:[#allocation2 + $0xe0] sm:$0xff]
    %v86 = vld [vmem:[#allocation2 + $0xe8] sm:$0xff]
    %v87 = vld [vmem:[#allocation2 + $0xf0] sm:$0xff]
    %v88 = vld [vmem:[#allocation2 + $0xf8] sm:$0xff]
    %v121 = vunpack.c.l.b16 %v57
    %v122 = vunpack.c.h.b16 %v57
    %v123 = vunpack.c.l.b16 %v58
    %v124 = vunpack.c.h.b16 %v58
    %v125 = vunpack.c.l.b16 %v59
    %v126 = vunpack.c.h.b16 %v59
    %v127 = vunpack.c.l.b16 %v60
    %v128 = vunpack.c.h.b16 %v60
    %v129 = vunpack.c.l.b16 %v61
    %v130 = vunpack.c.h.b16 %v61
    %v131 = vunpack.c.l.b16 %v62
    %v132 = vunpack.c.h.b16 %v62
    %v133 = vunpack.c.l.b16 %v63
    %v134 = vunpack.c.h.b16 %v63
    %v135 = vunpack.c.l.b16 %v64
    %v136 = vunpack.c.h.b16 %v64
    %v137 = vunpack.c.l.b16 %v65
    %v138 = vunpack.c.h.b16 %v65
    %v139 = vunpack.c.l.b16 %v66
    %v140 = vunpack.c.h.b16 %v66
    %v141 = vunpack.c.l.b16 %v67
    %v142 = vunpack.c.h.b16 %v67
    %v143 = vunpack.c.l.b16 %v68
    %v144 = vunpack.c.h.b16 %v68
    %v145 = vunpack.c.l.b16 %v69
    %v146 = vunpack.c.h.b16 %v69
    %v147 = vunpack.c.l.b16 %v70
    %v148 = vunpack.c.h.b16 %v70
    %v149 = vunpack.c.l.b16 %v71
    %v150 = vunpack.c.h.b16 %v71
    %v151 = vunpack.c.l.b16 %v72
    %v152 = vunpack.c.h.b16 %v72
    %v153 = vunpack.c.l.b16 %v73
    %v154 = vunpack.c.h.b16 %v73
    %v155 = vunpack.c.l.b16 %v74
    %v156 = vunpack.c.h.b16 %v74
    %v157 = vunpack.c.l.b16 %v75
    %v158 = vunpack.c.h.b16 %v75
    %v159 = vunpack.c.l.b16 %v76
    %v160 = vunpack.c.h.b16 %v76
    %v161 = vunpack.c.l.b16 %v77
    %v162 = vunpack.c.h.b16 %v77
    %v163 = vunpack.c.l.b16 %v78
    %v164 = vunpack.c.h.b16 %v78
    %v165 = vunpack.c.l.b16 %v79
    %v166 = vunpack.c.h.b16 %v79
    %v167 = vunpack.c.l.b16 %v80
    %v168 = vunpack.c.h.b16 %v80
    %v169 = vunpack.c.l.b16 %v81
    %v170 = vunpack.c.h.b16 %v81
    %v171 = vunpack.c.l.b16 %v82
    %v172 = vunpack.c.h.b16 %v82
    %v173 = vunpack.c.l.b16 %v83
    %v174 = vunpack.c.h.b16 %v83
    %v175 = vunpack.c.l.b16 %v84
    %v176 = vunpack.c.h.b16 %v84
    %v177 = vunpack.c.l.b16 %v85
    %v178 = vunpack.c.h.b16 %v85
    %v179 = vunpack.c.l.b16 %v86
    %v180 = vunpack.c.h.b16 %v86
    %v181 = vunpack.c.l.b16 %v87
    %v182 = vunpack.c.h.b16 %v87
    %v183 = vunpack.c.l.b16 %v88
    %v184 = vunpack.c.h.b16 %v88
    %v185 = vpack.c.b16 %v125, %v121
    %v186 = vpack.c.b16 %v126, %v122
    %v187 = vpack.c.b16 %v127, %v123
    %v188 = vpack.c.b16 %v128, %v124
    %v189 = vpack.c.b16 %v133, %v129
    %v190 = vpack.c.b16 %v134, %v130
    %v191 = vpack.c.b16 %v135, %v131
    %v192 = vpack.c.b16 %v136, %v132
    %v193 = vpack.c.b16 %v141, %v137
    %v194 = vpack.c.b16 %v142, %v138
    %v195 = vpack.c.b16 %v143, %v139
    %v196 = vpack.c.b16 %v144, %v140
    %v197 = vpack.c.b16 %v149, %v145
    %v198 = vpack.c.b16 %v150, %v146
    %v199 = vpack.c.b16 %v151, %v147
    %v200 = vpack.c.b16 %v152, %v148
    %v201 = vpack.c.b16 %v157, %v153
    %v202 = vpack.c.b16 %v158, %v154
    %v203 = vpack.c.b16 %v159, %v155
    %v204 = vpack.c.b16 %v160, %v156
    %v205 = vpack.c.b16 %v165, %v161
    %v206 = vpack.c.b16 %v166, %v162
    %v207 = vpack.c.b16 %v167, %v163
    %v208 = vpack.c.b16 %v168, %v164
    %v209 = vpack.c.b16 %v173, %v169
    %v210 = vpack.c.b16 %v174, %v170
    %v211 = vpack.c.b16 %v175, %v171
    %v212 = vpack.c.b16 %v176, %v172
    %v213 = vpack.c.b16 %v181, %v177
    %v214 = vpack.c.b16 %v182, %v178
    %v215 = vpack.c.b16 %v183, %v179
    %v216 = vpack.c.b16 %v184, %v180
    %249 = vmatprep.subr.bf16.mxu0 %v214
    %250 = vmatpush1.bf16.msra.mxu0 %v213
    %251 = vmatprep.subr.bf16.mxu0 %v210
    %252 = vmatpush1.bf16.msra.mxu0 %v209
    %253 = vmatprep.subr.bf16.mxu0 %v206
    %254 = vmatpush1.bf16.msra.mxu0 %v205
    %255 = vmatprep.subr.bf16.mxu0 %v202
    %256 = vmatpush1.bf16.msra.mxu0 %v201
    %257 = vmatprep.subr.bf16.mxu0 %v198
    %258 = vmatpush1.bf16.msra.mxu0 %v197
    %259 = vmatprep.subr.bf16.mxu0 %v194
    %260 = vmatpush1.bf16.msra.mxu0 %v193
    %261 = vmatprep.subr.bf16.mxu0 %v190
    %262 = vmatpush1.bf16.msra.mxu0 %v189
    %263 = vmatprep.subr.bf16.mxu0 %v186
    %264 = vmatpush1.bf16.msra.mxu0 %v185
    %265 = vmatprep.subr.bf16.mxu0 0
    %266 = vmatpush2.bf16.msra.mxu0 0
    %267 = vmatprep.subr.bf16.mxu0 0
    %268 = vmatpush2.bf16.msra.mxu0 0
    %269 = vmatprep.subr.bf16.mxu0 0
    %270 = vmatpush2.bf16.msra.mxu0 0
    %271 = vmatprep.subr.bf16.mxu0 0
    %272 = vmatpush2.bf16.msra.mxu0 0
    %273 = vmatprep.subr.bf16.mxu0 0
    %274 = vmatpush2.bf16.msra.mxu0 0
    %275 = vmatprep.subr.bf16.mxu0 0
    %276 = vmatpush2.bf16.msra.mxu0 0
    %277 = vmatprep.subr.bf16.mxu0 0
    %278 = vmatpush2.bf16.msra.mxu0 0
    %279 = vmatprep.subr.bf16.mxu0 0
    %280 = vmatpush2.bf16.msra.mxu0 0
    %281 = vmatprep.mubr.bf16.mxu0 0
    %282 = vmatmul.mubr.bf16.gmra.mxu0 %v56
    %v283 = vpop.f32.mrf.mxu0
    %v284 = vadd.f32 0.0, %v283
    %v285 = vpop.f32.mrf.mxu0
    %v286 = vadd.f32 0.0, %v285
    %v287 = vpop.f32.mrf.mxu0
    %v288 = vadd.f32 0.0, %v287
    %v289 = vpop.f32.mrf.mxu0
    %v290 = vadd.f32 0.0, %v289
    %291 = vdwg.mxu0
    %292 = vmatprep.subr.bf16.mxu0 %v216
    %293 = vmatpush1.bf16.msra.mxu0 %v215
    %294 = vmatprep.subr.bf16.mxu0 %v212
    %295 = vmatpush1.bf16.msra.mxu0 %v211
    %296 = vmatprep.subr.bf16.mxu0 %v208
    %297 = vmatpush1.bf16.msra.mxu0 %v207
    %298 = vmatprep.subr.bf16.mxu0 %v204
    %299 = vmatpush1.bf16.msra.mxu0 %v203
    %300 = vmatprep.subr.bf16.mxu0 %v200
    %301 = vmatpush1.bf16.msra.mxu0 %v199
    %302 = vmatprep.subr.bf16.mxu0 %v196
    %303 = vmatpush1.bf16.msra.mxu0 %v195
    %304 = vmatprep.subr.bf16.mxu0 %v192
    %305 = vmatpush1.bf16.msra.mxu0 %v191
    %306 = vmatprep.subr.bf16.mxu0 %v188
    %307 = vmatpush1.bf16.msra.mxu0 %v187
    %308 = vmatprep.subr.bf16.mxu0 0
    %309 = vmatpush2.bf16.msra.mxu0 0
    %310 = vmatprep.subr.bf16.mxu0 0
    %311 = vmatpush2.bf16.msra.mxu0 0
    %312 = vmatprep.subr.bf16.mxu0 0
    %313 = vmatpush2.bf16.msra.mxu0 0
    %314 = vmatprep.subr.bf16.mxu0 0
    %315 = vmatpush2.bf16.msra.mxu0 0
    %316 = vmatprep.subr.bf16.mxu0 0
    %317 = vmatpush2.bf16.msra.mxu0 0
    %318 = vmatprep.subr.bf16.mxu0 0
    %319 = vmatpush2.bf16.msra.mxu0 0
    %320 = vmatprep.subr.bf16.mxu0 0
    %321 = vmatpush2.bf16.msra.mxu0 0
    %322 = vmatprep.subr.bf16.mxu0 0
    %323 = vmatpush2.bf16.msra.mxu0 0
    %324 = vmatprep.mubr.bf16.mxu0 0
    %325 = vmatmul.mubr.bf16.gmra.mxu0 %v56
    %v326 = vpop.f32.mrf.mxu0
    %v327 = vadd.f32 0.0, %v326
    %v328 = vpop.f32.mrf.mxu0
    %v329 = vadd.f32 0.0, %v328
    %v330 = vpop.f32.mrf.mxu0
    %v331 = vadd.f32 0.0, %v330
    %v332 = vpop.f32.mrf.mxu0
    %v333 = vadd.f32 0.0, %v332
    %334 = vdwg.mxu0
    %v335 = vmax.f32 %v284, %v327
    %v336 = vmax.f32 %v286, %v329
    %v337 = vmax.f32 %v335, %v336
    %338 = vmax.xlane.f32.xlu0 %v337
    %v339 = vpop.xlane.xlu0 %338
    %v340 = vmax.f32 %v288, %v331
    %v341 = vmax.f32 %v290, %v333
    %v342 = vmax.f32 %v340, %v341
    %343 = vmax.xlane.f32.xlu0 %v342
    %v344 = vpop.xlane.xlu0 %343
    %v345 = vsub.f32 %v284, %v339
    %v346 = vsub.f32 %v286, %v339
    %v347 = vsub.f32 %v327, %v339
    %v348 = vsub.f32 %v329, %v339
    %v349 = vsub.f32 %v288, %v344
    %v350 = vsub.f32 %v290, %v344
    %v351 = vsub.f32 %v331, %v344
    %v352 = vsub.f32 %v333, %v344
    %v353 = vmul.f32 %v345, 1.442695
    %v354 = vpow.pop %v353
    %v355 = vmul.f32 %v346, 1.442695
    %v356 = vpow.pop %v355
    %v357 = vmul.f32 %v347, 1.442695
    %v358 = vpow.pop %v357
    %v359 = vmul.f32 %v348, 1.442695
    %v360 = vpow.pop %v359
    %v361 = vmul.f32 %v349, 1.442695
    %v362 = vpow.pop %v361
    %v363 = vmul.f32 %v350, 1.442695
    %v364 = vpow.pop %v363
    %v365 = vmul.f32 %v351, 1.442695
    %v366 = vpow.pop %v365
    %v367 = vmul.f32 %v352, 1.442695
    %v368 = vpow.pop %v367
    %v369 = vadd.f32 %v354, %v356
    %v370 = vadd.f32 %v369, %v358
    %v371 = vadd.f32 %v370, %v360
    %372 = vadd.xlane.f32.xlu0 %v371
    %v373 = vpop.xlane.xlu0 %372
    %v374 = vadd.f32 %v362, %v364
    %v375 = vadd.f32 %v374, %v366
    %v376 = vadd.f32 %v375, %v368
    %377 = vadd.xlane.f32.xlu0 %v376
    %v378 = vpop.xlane.xlu0 %377
    %v379 = vrcp.pop %v373
    %v380 = vmul.f32 %v354, %v379
    %v381 = vmul.f32 %v356, %v379
    %v382 = vmul.f32 %v358, %v379
    %v383 = vmul.f32 %v360, %v379
    %v384 = vrcp.pop %v378
    %v385 = vmul.f32 %v362, %v384
    %v386 = vmul.f32 %v364, %v384
    %v387 = vmul.f32 %v366, %v384
    %v388 = vmul.f32 %v368, %v384
    %389 = vst [vmem:[#allocation8] sm:$0xff] %v380
    %390 = vst [vmem:[#allocation8 + $0x8] sm:$0xff] %v381
    %391 = vst [vmem:[#allocation8 + $0x10] sm:$0xff] %v382
    %392 = vst [vmem:[#allocation8 + $0x18] sm:$0xff] %v383
    %393 = vst [vmem:[#allocation8 + $0x20] sm:$0xff] %v385
    %394 = vst [vmem:[#allocation8 + $0x28] sm:$0xff] %v386
    %395 = vst [vmem:[#allocation8 + $0x30] sm:$0xff] %v387
    %396 = vst [vmem:[#allocation8 + $0x38] sm:$0xff] %v388
    %v397 = vld [vmem:[%s1] sm:$0xff]
    %v398 = vld [vmem:[%s1 + $0x8] sm:$0xff]
    %v399 = vlaneseq
    %v400 = vand.u32 %v399, 127
    %v401 = vadd.s32 %v400, 128
    %v402 = vadd.s32 %v400, 256
    %v403 = vadd.s32 %v400, 384
    %404 = vset.pattern.permute.xlu0 0
    %405 = vperm.xlu0 %404, %v397
    %v406 = vpop.permute.xlu0 %405
    %407 = vset.pattern.permute.xlu0 0
    %408 = vperm.xlu0 %407, %v398
    %v409 = vpop.permute.xlu0 %408
    %vm410 = vcmp.eq.s32.totalorder %v400, %v406
    %vm411 = vcmp.eq.s32.totalorder %v401, %v406
    %vm412 = vcmp.eq.s32.totalorder %v402, %v406
    %vm413 = vcmp.eq.s32.totalorder %v403, %v406
    %vm414 = vcmp.eq.s32.totalorder %v400, %v409
    %vm415 = vcmp.eq.s32.totalorder %v401, %v409
    %vm416 = vcmp.eq.s32.totalorder %v402, %v409
    %vm417 = vcmp.eq.s32.totalorder %v403, %v409
    %v418 = vsel %vm410, %v284, 0.0
    %v419 = vsel %vm411, %v286, 0.0
    %v420 = vsel %vm412, %v327, 0.0
    %v421 = vsel %vm413, %v329, 0.0
    %v422 = vsel %vm414, %v288, 0.0
    %v423 = vsel %vm415, %v290, 0.0
    %v424 = vsel %vm416, %v331, 0.0
    %v425 = vsel %vm417, %v333, 0.0
    %v426 = vadd.f32 %v418, %v419
    %v427 = vadd.f32 %v426, %v420
    %v428 = vadd.f32 %v427, %v421
    %429 = vadd.xlane.f32.xlu0 %v428
    %v430 = vpop.xlane.xlu0 %429
    %v431 = vadd.f32 %v422, %v423
    %v432 = vadd.f32 %v431, %v424
    %v433 = vadd.f32 %v432, %v425
    %434 = vadd.xlane.f32.xlu0 %v433
    %v435 = vpop.xlane.xlu0 %434
    %vm436 = vcmp.ne.s32.totalorder %v397, 4294967196
    %vm437 = vcmp.ne.s32.totalorder %v398, 4294967196
    %v438 = vsel %vm436, 1, 0
    %v439 = vsel %vm437, 1, 0
    %v440 = vcvt.s32.f32 %v438
    %v441 = vcvt.s32.f32 %v439
    %vm442 = vcmask 7168
    %v443 = vsel %vm442, %v440, 0.0
    %v444 = vsel %vm442, %v441, 0.0
    %v445 = vadd.f32 %v443, %v444
    %446 = vadd.xlane.f32.xlu0 %v445
    %v447 = vpop.xlane.xlu0 %446
    %v448 = vrot.slane %v447, 4
    %v449 = vadd.f32 %v447, %v448
    %v450 = vrot.slane %v449, 2
    %v451 = vadd.f32 %v449, %v450
    %v452 = vrot.slane %v451, 1
    %v453 = vadd.f32 %v451, %v452
    %s454 = vtos %v453
    %s455 = smax.f32 %s454, 1.0
    %v456 = vstv %s455
    %v457 = vrcp.pop %v456
    %s458 = vtos %v457
    %v459 = vlog2.pop %v373
    %v460 = vmul.f32 %v459, 0.6931472
    %v461 = vlog2.pop %v378
    %v462 = vmul.f32 %v461, 0.6931472
    %v463 = vadd.f32 %v339, %v460
    %v464 = vadd.f32 %v344, %v462
    %v465 = vsub.f32 %v463, %v430
    %v466 = vsub.f32 %v464, %v435
    %v467 = vmul.f32 %v465, %v440
    %v468 = vmul.f32 %v466, %v441
    %v469 = vsel %vm442, %v467, 0.0
    %v470 = vsel %vm442, %v468, 0.0
    %v471 = vadd.f32 %v469, %v470
    %472 = vadd.xlane.f32.xlu0 %v471
    %v473 = vpop.xlane.xlu0 %472
    %v474 = vrot.slane %v473, 4
    %v475 = vadd.f32 %v473, %v474
    %v476 = vrot.slane %v475, 2
    %v477 = vadd.f32 %v475, %v476
    %v478 = vrot.slane %v477, 1
    %v479 = vadd.f32 %v477, %v478
    %s480 = vtos %v479
    %s481 = smul.f32 %s480, %s458
    %s482 = scalar_lea.smem [#allocation11], 0
    %483 = sst [smem:[%s482]] %s481
    %v484 = vsub.f32 %v380, 1.0
    %v485 = vsub.f32 %v381, 1.0
    %v486 = vsub.f32 %v382, 1.0
    %v487 = vsub.f32 %v383, 1.0
    %v488 = vsub.f32 %v385, 1.0
    %v489 = vsub.f32 %v386, 1.0
    %v490 = vsub.f32 %v387, 1.0
    %v491 = vsub.f32 %v388, 1.0
    %v492 = vsel %vm410, %v484, %v380
    %v493 = vsel %vm411, %v485, %v381
    %v494 = vsel %vm412, %v486, %v382
    %v495 = vsel %vm413, %v487, %v383
    %v496 = vsel %vm414, %v488, %v385
    %v497 = vsel %vm415, %v489, %v386
    %v498 = vsel %vm416, %v490, %v387
    %v499 = vsel %vm417, %v491, %v388
    %v500 = vstv %s458
    %v501 = vmul.f32 %v440, %v500
    %v502 = vmul.f32 %v441, %v500
    %504 = vset.pattern.permute.xlu0 0
    %505 = vperm.xlu0 %504, %v501
    %v506 = vpop.permute.xlu0 %505
    %509 = vset.pattern.permute.xlu0 0
    %510 = vperm.xlu0 %509, %v502
    %v511 = vpop.permute.xlu0 %510
    %v513 = vmul.f32 %v492, %v506
    %v514 = vmul.f32 %v493, %v506
    %v515 = vmul.f32 %v494, %v506
    %v516 = vmul.f32 %v495, %v506
    %v517 = vmul.f32 %v496, %v511
    %v518 = vmul.f32 %v497, %v511
    %v519 = vmul.f32 %v498, %v511
    %v520 = vmul.f32 %v499, %v511
    %v521 = vpack.c.bf16 %v517, %v513
    %v522 = vpack.c.bf16 %v518, %v514
    %v523 = vpack.c.bf16 %v519, %v515
    %v524 = vpack.c.bf16 %v520, %v516
    %v525 = vld [vmem:[#allocation6] sm:$0xf]
    %v526 = vld [vmem:[#allocation6 + $0x4] sm:$0xf]
    %v527 = vld [vmem:[#allocation6 + $0x8] sm:$0xf]
    %v528 = vld [vmem:[#allocation6 + $0xc] sm:$0xf]
    %v529 = vld [vmem:[#allocation6 + $0x10] sm:$0xf]
    %v530 = vld [vmem:[#allocation6 + $0x14] sm:$0xf]
    %v531 = vld [vmem:[#allocation6 + $0x18] sm:$0xf]
    %v532 = vld [vmem:[#allocation6 + $0x1c] sm:$0xf]
    %v533 = vld [vmem:[#allocation6 + $0x20] sm:$0xf]
    %v534 = vld [vmem:[#allocation6 + $0x24] sm:$0xf]
    %v535 = vld [vmem:[#allocation6 + $0x28] sm:$0xf]
    %v536 = vld [vmem:[#allocation6 + $0x2c] sm:$0xf]
    %v537 = vld [vmem:[#allocation6 + $0x30] sm:$0xf]
    %v538 = vld [vmem:[#allocation6 + $0x34] sm:$0xf]
    %v539 = vld [vmem:[#allocation6 + $0x38] sm:$0xf]
    %v540 = vld [vmem:[#allocation6 + $0x3c] sm:$0xf]
    %v541 = vld [vmem:[#allocation6 + $0x40] sm:$0xf]
    %v542 = vld [vmem:[#allocation6 + $0x44] sm:$0xf]
    %v543 = vld [vmem:[#allocation6 + $0x48] sm:$0xf]
    %v544 = vld [vmem:[#allocation6 + $0x4c] sm:$0xf]
    %v545 = vld [vmem:[#allocation6 + $0x50] sm:$0xf]
    %v546 = vld [vmem:[#allocation6 + $0x54] sm:$0xf]
    %v547 = vld [vmem:[#allocation6 + $0x58] sm:$0xf]
    %v548 = vld [vmem:[#allocation6 + $0x5c] sm:$0xf]
    %v549 = vld [vmem:[#allocation6 + $0x60] sm:$0xf]
    %v550 = vld [vmem:[#allocation6 + $0x64] sm:$0xf]
    %v551 = vld [vmem:[#allocation6 + $0x68] sm:$0xf]
    %v552 = vld [vmem:[#allocation6 + $0x6c] sm:$0xf]
    %v553 = vld [vmem:[#allocation6 + $0x70] sm:$0xf]
    %v554 = vld [vmem:[#allocation6 + $0x74] sm:$0xf]
    %v555 = vld [vmem:[#allocation6 + $0x78] sm:$0xf]
    %v556 = vld [vmem:[#allocation6 + $0x7c] sm:$0xf]
    %v557 = vld [vmem:[#allocation6 + $0x80] sm:$0xf]
    %v558 = vld [vmem:[#allocation6 + $0x84] sm:$0xf]
    %v559 = vld [vmem:[#allocation6 + $0x88] sm:$0xf]
    %v560 = vld [vmem:[#allocation6 + $0x8c] sm:$0xf]
    %v561 = vld [vmem:[#allocation6 + $0x90] sm:$0xf]
    %v562 = vld [vmem:[#allocation6 + $0x94] sm:$0xf]
    %v563 = vld [vmem:[#allocation6 + $0x98] sm:$0xf]
    %v564 = vld [vmem:[#allocation6 + $0x9c] sm:$0xf]
    %v565 = vld [vmem:[#allocation6 + $0xa0] sm:$0xf]
    %v566 = vld [vmem:[#allocation6 + $0xa4] sm:$0xf]
    %v567 = vld [vmem:[#allocation6 + $0xa8] sm:$0xf]
    %v568 = vld [vmem:[#allocation6 + $0xac] sm:$0xf]
    %v569 = vld [vmem:[#allocation6 + $0xb0] sm:$0xf]
    %v570 = vld [vmem:[#allocation6 + $0xb4] sm:$0xf]
    %v571 = vld [vmem:[#allocation6 + $0xb8] sm:$0xf]
    %v572 = vld [vmem:[#allocation6 + $0xbc] sm:$0xf]
    %v573 = vld [vmem:[#allocation6 + $0xc0] sm:$0xf]
    %v574 = vld [vmem:[#allocation6 + $0xc4] sm:$0xf]
    %v575 = vld [vmem:[#allocation6 + $0xc8] sm:$0xf]
    %v576 = vld [vmem:[#allocation6 + $0xcc] sm:$0xf]
    %v577 = vld [vmem:[#allocation6 + $0xd0] sm:$0xf]
    %v578 = vld [vmem:[#allocation6 + $0xd4] sm:$0xf]
    %v579 = vld [vmem:[#allocation6 + $0xd8] sm:$0xf]
    %v580 = vld [vmem:[#allocation6 + $0xdc] sm:$0xf]
    %v581 = vld [vmem:[#allocation6 + $0xe0] sm:$0xf]
    %v582 = vld [vmem:[#allocation6 + $0xe4] sm:$0xf]
    %v583 = vld [vmem:[#allocation6 + $0xe8] sm:$0xf]
    %v584 = vld [vmem:[#allocation6 + $0xec] sm:$0xf]
    %v585 = vld [vmem:[#allocation6 + $0xf0] sm:$0xf]
    %v586 = vld [vmem:[#allocation6 + $0xf4] sm:$0xf]
    %v587 = vld [vmem:[#allocation6 + $0xf8] sm:$0xf]
    %v588 = vld [vmem:[#allocation6 + $0xfc] sm:$0xf]
    %v653 = vunpack.c.l.b16 %v525
    %v654 = vunpack.c.l.b16 %v526
    %v655 = vunpack.c.l.b16 %v527
    %v656 = vunpack.c.l.b16 %v528
    %v657 = vunpack.c.l.b16 %v529
    %v658 = vunpack.c.l.b16 %v530
    %v659 = vunpack.c.l.b16 %v531
    %v660 = vunpack.c.l.b16 %v532
    %v661 = vunpack.c.l.b16 %v533
    %v662 = vunpack.c.l.b16 %v534
    %v663 = vunpack.c.l.b16 %v535
    %v664 = vunpack.c.l.b16 %v536
    %v665 = vunpack.c.l.b16 %v537
    %v666 = vunpack.c.l.b16 %v538
    %v667 = vunpack.c.l.b16 %v539
    %v668 = vunpack.c.l.b16 %v540
    %v669 = vunpack.c.l.b16 %v541
    %v670 = vunpack.c.l.b16 %v542
    %v671 = vunpack.c.l.b16 %v543
    %v672 = vunpack.c.l.b16 %v544
    %v673 = vunpack.c.l.b16 %v545
    %v674 = vunpack.c.l.b16 %v546
    %v675 = vunpack.c.l.b16 %v547
    %v676 = vunpack.c.l.b16 %v548
    %v677 = vunpack.c.l.b16 %v549
    %v678 = vunpack.c.l.b16 %v550
    %v679 = vunpack.c.l.b16 %v551
    %v680 = vunpack.c.l.b16 %v552
    %v681 = vunpack.c.l.b16 %v553
    %v682 = vunpack.c.l.b16 %v554
    %v683 = vunpack.c.l.b16 %v555
    %v684 = vunpack.c.l.b16 %v556
    %v685 = vunpack.c.l.b16 %v557
    %v686 = vunpack.c.l.b16 %v558
    %v687 = vunpack.c.l.b16 %v559
    %v688 = vunpack.c.l.b16 %v560
    %v689 = vunpack.c.l.b16 %v561
    %v690 = vunpack.c.l.b16 %v562
    %v691 = vunpack.c.l.b16 %v563
    %v692 = vunpack.c.l.b16 %v564
    %v693 = vunpack.c.l.b16 %v565
    %v694 = vunpack.c.l.b16 %v566
    %v695 = vunpack.c.l.b16 %v567
    %v696 = vunpack.c.l.b16 %v568
    %v697 = vunpack.c.l.b16 %v569
    %v698 = vunpack.c.l.b16 %v570
    %v699 = vunpack.c.l.b16 %v571
    %v700 = vunpack.c.l.b16 %v572
    %v701 = vunpack.c.l.b16 %v573
    %v702 = vunpack.c.l.b16 %v574
    %v703 = vunpack.c.l.b16 %v575
    %v704 = vunpack.c.l.b16 %v576
    %v705 = vunpack.c.l.b16 %v577
    %v706 = vunpack.c.l.b16 %v578
    %v707 = vunpack.c.l.b16 %v579
    %v708 = vunpack.c.l.b16 %v580
    %v709 = vunpack.c.l.b16 %v581
    %v710 = vunpack.c.l.b16 %v582
    %v711 = vunpack.c.l.b16 %v583
    %v712 = vunpack.c.l.b16 %v584
    %v713 = vunpack.c.l.b16 %v585
    %v714 = vunpack.c.l.b16 %v586
    %v715 = vunpack.c.l.b16 %v587
    %v716 = vunpack.c.l.b16 %v588
    %v717 = vpack.c.b16 %v654, %v653
    %v718 = vpack.c.b16 %v656, %v655
    %v719 = vpack.c.b16 %v658, %v657
    %v720 = vpack.c.b16 %v660, %v659
    %v721 = vpack.c.b16 %v662, %v661
    %v722 = vpack.c.b16 %v664, %v663
    %v723 = vpack.c.b16 %v666, %v665
    %v724 = vpack.c.b16 %v668, %v667
    %v725 = vpack.c.b16 %v670, %v669
    %v726 = vpack.c.b16 %v672, %v671
    %v727 = vpack.c.b16 %v674, %v673
    %v728 = vpack.c.b16 %v676, %v675
    %v729 = vpack.c.b16 %v678, %v677
    %v730 = vpack.c.b16 %v680, %v679
    %v731 = vpack.c.b16 %v682, %v681
    %v732 = vpack.c.b16 %v684, %v683
    %v733 = vpack.c.b16 %v686, %v685
    %v734 = vpack.c.b16 %v688, %v687
    %v735 = vpack.c.b16 %v690, %v689
    %v736 = vpack.c.b16 %v692, %v691
    %v737 = vpack.c.b16 %v694, %v693
    %v738 = vpack.c.b16 %v696, %v695
    %v739 = vpack.c.b16 %v698, %v697
    %v740 = vpack.c.b16 %v700, %v699
    %v741 = vpack.c.b16 %v702, %v701
    %v742 = vpack.c.b16 %v704, %v703
    %v743 = vpack.c.b16 %v706, %v705
    %v744 = vpack.c.b16 %v708, %v707
    %v745 = vpack.c.b16 %v710, %v709
    %v746 = vpack.c.b16 %v712, %v711
    %v747 = vpack.c.b16 %v714, %v713
    %v748 = vpack.c.b16 %v716, %v715
    %781 = vmatprep.subr.bf16.mxu0 0
    %782 = vmatpush1.bf16.msra.mxu0 %v724
    %783 = vmatprep.subr.bf16.mxu0 0
    %784 = vmatpush1.bf16.msra.mxu0 %v723
    %785 = vmatprep.subr.bf16.mxu0 0
    %786 = vmatpush1.bf16.msra.mxu0 %v722
    %787 = vmatprep.subr.bf16.mxu0 0
    %788 = vmatpush1.bf16.msra.mxu0 %v721
    %789 = vmatprep.subr.bf16.mxu0 0
    %790 = vmatpush1.bf16.msra.mxu0 %v720
    %791 = vmatprep.subr.bf16.mxu0 0
    %792 = vmatpush1.bf16.msra.mxu0 %v719
    %793 = vmatprep.subr.bf16.mxu0 0
    %794 = vmatpush1.bf16.msra.mxu0 %v718
    %795 = vmatprep.subr.bf16.mxu0 0
    %796 = vmatpush1.bf16.msra.mxu0 %v717
    %797 = vmatprep.subr.bf16.mxu0 0
    %798 = vmatpush2.bf16.msra.mxu0 %v732
    %799 = vmatprep.subr.bf16.mxu0 0
    %800 = vmatpush2.bf16.msra.mxu0 %v731
    %801 = vmatprep.subr.bf16.mxu0 0
    %802 = vmatpush2.bf16.msra.mxu0 %v730
    %803 = vmatprep.subr.bf16.mxu0 0
    %804 = vmatpush2.bf16.msra.mxu0 %v729
    %805 = vmatprep.subr.bf16.mxu0 0
    %806 = vmatpush2.bf16.msra.mxu0 %v728
    %807 = vmatprep.subr.bf16.mxu0 0
    %808 = vmatpush2.bf16.msra.mxu0 %v727
    %809 = vmatprep.subr.bf16.mxu0 0
    %810 = vmatpush2.bf16.msra.mxu0 %v726
    %811 = vmatprep.subr.bf16.mxu0 0
    %812 = vmatpush2.bf16.msra.mxu0 %v725
    %813 = vmatprep.mubr.bf16.mxu0 %v522
    %814 = vmatmul.mubr.bf16.gmra.mxu0 %v521
    %v815 = vpop.f32.mrf.mxu0
    %v816 = vadd.f32 0.0, %v815
    %v817 = vpop.f32.mrf.mxu0
    %v818 = vpop.f32.mrf.mxu0
    %v819 = vadd.f32 0.0, %v818
    %v820 = vpop.f32.mrf.mxu0
    %821 = vdwg.mxu0
    %822 = vmatprep.subr.bf16.mxu0 0
    %823 = vmatpush1.bf16.msra.mxu0 %v740
    %824 = vmatprep.subr.bf16.mxu0 0
    %825 = vmatpush1.bf16.msra.mxu0 %v739
    %826 = vmatprep.subr.bf16.mxu0 0
    %827 = vmatpush1.bf16.msra.mxu0 %v738
    %828 = vmatprep.subr.bf16.mxu0 0
    %829 = vmatpush1.bf16.msra.mxu0 %v737
    %830 = vmatprep.subr.bf16.mxu0 0
    %831 = vmatpush1.bf16.msra.mxu0 %v736
    %832 = vmatprep.subr.bf16.mxu0 0
    %833 = vmatpush1.bf16.msra.mxu0 %v735
    %834 = vmatprep.subr.bf16.mxu0 0
    %835 = vmatpush1.bf16.msra.mxu0 %v734
    %836 = vmatprep.subr.bf16.mxu0 0
    %837 = vmatpush1.bf16.msra.mxu0 %v733
    %838 = vmatprep.subr.bf16.mxu0 0
    %839 = vmatpush2.bf16.msra.mxu0 %v748
    %840 = vmatprep.subr.bf16.mxu0 0
    %841 = vmatpush2.bf16.msra.mxu0 %v747
    %842 = vmatprep.subr.bf16.mxu0 0
    %843 = vmatpush2.bf16.msra.mxu0 %v746
    %844 = vmatprep.subr.bf16.mxu0 0
    %845 = vmatpush2.bf16.msra.mxu0 %v745
    %846 = vmatprep.subr.bf16.mxu0 0
    %847 = vmatpush2.bf16.msra.mxu0 %v744
    %848 = vmatprep.subr.bf16.mxu0 0
    %849 = vmatpush2.bf16.msra.mxu0 %v743
    %850 = vmatprep.subr.bf16.mxu0 0
    %851 = vmatpush2.bf16.msra.mxu0 %v742
    %852 = vmatprep.subr.bf16.mxu0 0
    %853 = vmatpush2.bf16.msra.mxu0 %v741
    %854 = vmatprep.mubr.bf16.mxu0 %v524
    %855 = vmatmul.mubr.bf16.gmra.mxu0 %v523
    %v856 = vpop.f32.mrf.mxu0
    %v857 = vadd.f32 %v816, %v856
    %v858 = vpop.f32.mrf.mxu0
    %v859 = vpop.f32.mrf.mxu0
    %v860 = vadd.f32 %v819, %v859
    %v861 = vpop.f32.mrf.mxu0
    %862 = vdwg.mxu0
    %v863 = vmul.f32 %v857, %v857
    %v864 = vmul.f32 %v860, %v860
    %865 = vadd.xlane.f32.xlu0 %v863
    %v866 = vpop.xlane.xlu0 %865
    %867 = vadd.xlane.f32.xlu0 %v864
    %v868 = vpop.xlane.xlu0 %867
    %v869 = vrsqrt.pop %v866
    %v870 = vmul.f32 %v866, %v869
    %vm871 = vcmp.eq.f32.partialorder %v866, inf
    %v872 = vsel %vm871, %v866, %v870
    %vm873 = vcmp.eq.f32.partialorder %v866, 0.0
    %v874 = vand.u32 %v866, 2147483648
    %v875 = vsel %vm873, %v874, %v872
    %v876 = vrsqrt.pop %v868
    %v877 = vmul.f32 %v868, %v876
    %vm878 = vcmp.eq.f32.partialorder %v868, inf
    %v879 = vsel %vm878, %v868, %v877
    %vm880 = vcmp.eq.f32.partialorder %v868, 0.0
    %v881 = vand.u32 %v868, 2147483648
    %v882 = vsel %vm880, %v881, %v879
    %v883 = vadd.f32 %v875, 1e-12
    %v884 = vadd.f32 %v882, 1e-12
    %v885 = vrcp.pop %v883
    %v886 = vmul.f32 %v857, %v885
    %v887 = vrcp.pop %v884
    %v888 = vmul.f32 %v860, %v887
    %v889 = vadd.f32 %v54, %v886
    %v890 = vadd.f32 %v55, %v888
    %891 = vst [vmem:[#allocation9] sm:$0xff] %v889
    %892 = vst [vmem:[#allocation9 + $0x8] sm:$0xff] %v890
    // Predicated region
    $region26: #{adv_t5_forward.1} parent=1 // pred_check
      _
    $region27: #{adv_t5_forward.1} parent=1 // pred_check_branch
      %894 = sbr.rel (0) target = $region29
    $region28: #{adv_t5_forward.1} parent=1 // pred_region
      %s896 = ssub.s32 1024, 1024
      %897 = vsyncadd [#allocation4], %s896
      %s898 = sshll.u32 [#allocation8], 4
      %s899 = int_to_ptr.vmem [resolvable:$true] %s898
      %904 = dma.vmem_to_hbm [thread:$0]  %s899, 1024, %s4, [#allocation4], 512, 512, 32
    $region29: #{adv_t5_forward.1} parent=1 // pred_fallthru
      _
    // Predicated region
    $region30: #{adv_t5_forward.1} parent=1 // pred_check
      _
    $region31: #{adv_t5_forward.1} parent=1 // pred_check_branch
      %906 = sbr.rel (0) target = $region33
    $region32: #{adv_t5_forward.1} parent=1 // pred_region
      %s908 = ssub.s32 256, 256
      %909 = vsyncadd [#allocation10], %s908
      %s910 = sshll.u32 [#allocation9], 4
      %s911 = int_to_ptr.vmem [resolvable:$true] %s910
      %916 = dma.vmem_to_hbm [thread:$0]  %s911, 256, %s5, [#allocation10], 128, 128, 8
    $region33: #{adv_t5_forward.1} parent=1 // pred_fallthru
      _
    // Predicated region
    $region34: #{adv_t5_forward.1} parent=1 // pred_check
      _
    $region35: #{adv_t5_forward.1} parent=1 // pred_check_branch
      %918 = sbr.rel (0) target = $region37
    $region36: #{adv_t5_forward.1} parent=1 // pred_region
      %s920 = ssub.s32 16, 16
      %921 = vsyncadd [#allocation5], %s920
      %924 = dma.smem_to_hbm [#allocation11], 16, %s6, [#allocation5]
    $region37: #{adv_t5_forward.1} parent=1 // pred_fallthru
      _
    // Predicated region
    $region38: #{adv_t5_forward.1} parent=1 // pred_check
      _
    $region39: #{adv_t5_forward.1} parent=1 // pred_check_branch
      %926 = sbr.rel (0) target = $region41
    $region40: #{adv_t5_forward.1} parent=1 // pred_region
      %927 = dma.done [#allocation4], 1024
    $region41: #{adv_t5_forward.1} parent=1 // pred_fallthru
      _
    // Predicated region
    $region42: #{adv_t5_forward.1} parent=1 // pred_check
      _
    $region43: #{adv_t5_forward.1} parent=1 // pred_check_branch
      %929 = sbr.rel (0) target = $region45
    $region44: #{adv_t5_forward.1} parent=1 // pred_region
      %930 = dma.done [#allocation10], 256
    $region45: #{adv_t5_forward.1} parent=1 // pred_fallthru
      _
    // Predicated region
    $region46: #{adv_t5_forward.1} parent=1 // pred_check
      _
    $region47: #{adv_t5_forward.1} parent=1 // pred_check_branch
      %932 = sbr.rel (0) target = $region49
    $region48: #{adv_t5_forward.1} parent=1 // pred_region
      %933 = dma.done [#allocation5], 16
    $region49: #{adv_t5_forward.1} parent=1 // pred_fallthru
      _
    %934 = sfence
    %935 = vsyncpa [#allocation3], 1
    %936 = vsyncpa [#allocation7], 1
    %937 = vsyncpa [#allocation4], 1
    %938 = vsyncpa [#allocation10], 1
    %939 = vsyncpa [#allocation5], 1

</llo_original>
